<compile_context>
chip_gen: v5e
topology: v5e:2x2
jax: 0.10.0
libtpu: 0.0.40
codegen_flags: <defaults>
</compile_context>

<pallas_src>
import jax
import jax.numpy as jnp
from jax import lax
from jax.experimental import pallas as pl
from jax.experimental.pallas import tpu as pltpu

_LANES = 128
_SUB_ROWS = 512  # rows per inner f32 accumulation slice (multiple of 8)


def _round_up(v, m):
    return (v + m - 1) // m * m


def _tpu_defaults():
    """Best-effort per-generation tuning: (per-input block bytes, vmem limit, #TensorCores)."""
    vmem_cap = None
    kind = ""
    try:
        cap = getattr(pltpu.get_tpu_info(), "vmem_capacity_bytes", None)
        vmem_cap = int(cap) if cap else None
    except Exception:
        vmem_cap = None
    try:
        kind = jax.devices()[0].device_kind.lower()
    except Exception:
        kind = ""
    # Conservative default == v5e tuning (its default scoped VMEM is only 16 MiB,
    # so the explicit 32 MiB limit is required there).
    blk, limit, n_tc = 4 << 20, 32 << 20, 1
    if vmem_cap is not None and vmem_cap <= (64 << 20):
        # v7x-class: 64 MiB VMEM per TC, ~3.2 TB/s HBM, 2 TensorCores per chip.
        blk, limit, n_tc = 8 << 20, 40 << 20, 2
    elif "v6" in kind:
        # v6e: 128 MiB VMEM, ~1.4 TB/s HBM, single TC.
        blk, limit, n_tc = 8 << 20, 64 << 20, 1
    return blk, limit, n_tc


def _make_dice_kernel(B, rows, ts, steps, sub, nsub_full, rem, full_blocks, total_blocks):
    """Build the reduction kernel with all tiling parameters baked in statically."""
    need_mask = total_blocks > full_blocks

    def kernel(x_ref, t_ref, inter_ref, card_ref):
        # Grid = (splits, steps): p = independent split (a TensorCore on dual-TC
        # chips), k = reduction step along the row axis.
        k = pl.program_id(1)
        l = pl.program_id(0) * steps + k      # linear block index along the row axis
        blk_row0 = l * ts                     # first logical row of this block

        @pl.when(k == 0)
        def _():
            inter_ref[...] = jnp.zeros_like(inter_ref)
            card_ref[...] = jnp.zeros_like(card_ref)

        def sub_accum(row0, nrows, mask_rows):
            # Static slice of the current block (zero-cost view), in-kernel f32 upcast.
            xs = x_ref[:, pl.ds(row0, nrows), :].astype(jnp.float32)
            tt = t_ref[:, pl.ds(row0, nrows), :].astype(jnp.float32)
            if mask_rows:
                # Rows at/after `rows` belong to the partial trailing block and hold
                # unspecified data: select zeros (neutral for both sums).
                rid = lax.broadcasted_iota(jnp.int32, (nrows, _LANES), 0)
                valid = (blk_row0 + row0 + rid) < rows
                xs = jnp.where(valid, xs, 0.0)
                tt = jnp.where(valid, tt, 0.0)
            # Reduce 8-row groups with pure vreg adds; keep the (8, 128) sublane/lane
            # structure so no cross-sublane (XLU) reduce happens in the hot loop.
            inter_ref[...] += (xs * tt).reshape(B, nrows // 8, 8, _LANES).sum(axis=1)
            card_ref[...] += (xs + tt).reshape(B, nrows // 8, 8, _LANES).sum(axis=1)

        def accumulate(mask_rows):
            row0 = 0
            for _ in range(nsub_full):        # static unrolled strip-mine loop
                sub_accum(row0, sub, mask_rows)
                row0 += sub
            if rem:
                sub_accum(row0, rem, mask_rows)

        if not need_mask:
            accumulate(False)
        else:
            is_full = l < full_blocks

            @pl.when(is_full)
            def _():
                accumulate(False)             # fast path: no masking

            @pl.when(jnp.logical_not(is_full))
            def _():
                accumulate(True)              # only the (rare) tail block(s)

    return kernel


def dice_loss_normal2(x, target, eps=1e-7, *, target_block_bytes=None,
                      vmem_limit_bytes=None, splits=None):
    """JAX/Pallas equivalent of the PyTorch dice_loss_normal2.forward (NCDHW input)."""
    assert x.shape == target.shape and x.ndim == 5
    B = int(x.shape[0])
    N = 1
    for d in x.shape[1:]:
        N *= int(d)

    blk_default, limit_default, n_tc = _tpu_defaults()
    block_bytes = int(target_block_bytes) if target_block_bytes else blk_default
    vmem_limit = int(vmem_limit_bytes) if vmem_limit_bytes else limit_default

    # Flatten per batch element. Pad only to the next multiple of 8*128 elements
    # (<= 1023 zeros per batch row); when N % 1024 == 0 this is a pure metadata
    # reshape with no extra HBM traffic.
    n_pad = _round_up(N, 8 * _LANES)
    rows = n_pad // _LANES                    # multiple of 8, >= 8
    xf = x.reshape(B, N)
    tf = target.reshape(B, N)
    if n_pad != N:
        xf = jnp.pad(xf, ((0, 0), (0, n_pad - N)))
        tf = jnp.pad(tf, ((0, 0), (0, n_pad - N)))
    xf = xf.reshape(B, rows, _LANES)
    tf = tf.reshape(B, rows, _LANES)

    itemsize = max(jnp.dtype(x.dtype).itemsize, jnp.dtype(target.dtype).itemsize)

    # Base tile from the per-input VMEM block budget (native dtype, no wrapper upcast).
    ts0 = max(8, (block_bytes // (B * _LANES * itemsize)) // 8 * 8)
    ts0 = min(ts0, rows)

    # 2-way split only on dual-TensorCore chips (v7x) and only with enough work;
    # on single-TC chips (v5e/v6e) a second split is just serial overhead.
    n_splits = n_tc if splits is None else max(1, int(splits))
    if n_splits > 1 and rows < n_splits * ts0:
        n_splits = 1

    # Rebalance: cover `rows` with at most a few x8 rows of slack (handled by the
    # in-kernel mask), never a whole chunk of padded zero work.
    steps = pl.cdiv(rows, n_splits * ts0)
    ts = min(_round_up(pl.cdiv(rows, n_splits * steps), 8), rows)

    total_blocks = n_splits * steps
    full_blocks = rows // ts                  # blocks fully inside [0, rows)

    sub = min(ts, _SUB_ROWS)                  # strip-mine slice (multiple of 8)
    nsub_full = ts // sub
    rem = ts % sub

    max_blk = pl.cdiv(rows, ts) - 1
    if total_blocks > full_blocks:
        # Clamp so a (rare) fully out-of-range trailing block never addresses past the
        # array; its contribution is zeroed by the in-kernel mask anyway.
        def row_block(p, k):
            return (0, jnp.minimum(p * steps + k, max_blk), 0)
    else:
        def row_block(p, k):
            return (0, p * steps + k, 0)

    in_spec = pl.BlockSpec((B, ts, _LANES), row_block)
    # Lane/sublane-dense (B, 8, 128) accumulator per split, resident across the
    # reduction axis (index map ignores k).
    out_spec = pl.BlockSpec((None, B, 8, _LANES), lambda p, k: (p, 0, 0, 0))

    kernel = _make_dice_kernel(B, rows, ts, steps, sub, nsub_full, rem,
                               full_blocks, total_blocks)

    bytes_in = B * n_pad * (jnp.dtype(x.dtype).itemsize
                            + jnp.dtype(target.dtype).itemsize)
    cost = pl.CostEstimate(
        flops=4 * B * n_pad,
        transcendentals=0,
        bytes_accessed=bytes_in + 2 * n_splits * B * 8 * _LANES * 4,
    )

    inter, card = pl.pallas_call(
        kernel,
        out_shape=(
            jax.ShapeDtypeStruct((n_splits, B, 8, _LANES), jnp.float32),
            jax.ShapeDtypeStruct((n_splits, B, 8, _LANES), jnp.float32),
        ),
        grid_spec=pltpu.PrefetchScalarGridSpec(
            num_scalar_prefetch=0,
            grid=(n_splits, steps),
            in_specs=[in_spec, in_spec],
            out_specs=[out_spec, out_spec],
        ),
        compiler_params=pltpu.CompilerParams(
            # "parallel" lets megacore / dual-TC chips shard the split axis across
            # TensorCores; it is a harmless size-1 (or serial) axis elsewhere.
            dimension_semantics=("parallel", "arbitrary"),
            vmem_limit_bytes=vmem_limit,
        ),
        cost_estimate=cost,
    )(xf, tf)

    intersection = jnp.sum(inter, axis=(0, 2, 3))   # (B,) == torch.sum(x*target, dims)
    cardinality = jnp.sum(card, axis=(0, 2, 3))     # (B,) == torch.sum(x+target, dims)
    dice_score = 2.0 * intersection / (cardinality + eps)
    return jnp.mean(1.0 - dice_score)


def _reference(x, target, eps=1e-7):
    xf = x.astype(jnp.float32)
    tf = target.astype(jnp.float32)
    dims = (1, 2, 3, 4)
    intersection = jnp.sum(xf * tf, axis=dims)
    cardinality = jnp.sum(xf + tf, axis=dims)
    dice = 2.0 * intersection / (cardinality + eps)
    return jnp.mean(1.0 - dice)


if __name__ == "__main__":
    key = jax.random.PRNGKey(0)

    def make_inputs(k, shape, dtype=jnp.float32):
        kx, kt = jax.random.split(k)
        xv = jax.random.uniform(kx, shape, dtype=jnp.float32).astype(dtype)
        tv = (jax.random.uniform(kt, shape, dtype=jnp.float32) > 0.5).astype(dtype)
        return xv, tv

    k0, k1, k2, k3 = jax.random.split(key, 4)

    # 1) Small 5-D case (N == 1024): pure-metadata reshape, single block, no mask.
    x, t = make_inputs(k0, (2, 4, 4, 8, 8))
    loss = jax.block_until_ready(dice_loss_normal2(x, t))
    ref = _reference(x, t)
    assert jnp.allclose(loss, ref, rtol=1e-5, atol=1e-5), (loss, ref)

    # 2) Odd spatial dims (N=210): exercises the small zero-pad to the next
    #    multiple of 8 rows (zeros are neutral for both sums).
    x2, t2 = make_inputs(k1, (3, 2, 3, 5, 7))
    loss2 = jax.block_until_ready(dice_loss_normal2(x2, t2))
    ref2 = _reference(x2, t2)
    assert jnp.allclose(loss2, ref2, rtol=1e-5, atol=1e-5), (loss2, ref2)

    # 3) bf16 inputs, tiny forced block + forced 2-way split: exercises multi-step
    #    accumulation along the "arbitrary" axis and per-split accumulators
    #    (the split axis is auto-disabled on single-TC chips by default).
    x3, t3 = make_inputs(k2, (2, 4, 8, 16, 32), dtype=jnp.bfloat16)
    loss3 = jax.block_until_ready(
        dice_loss_normal2(x3, t3, target_block_bytes=16 * 1024, splits=2))
    ref3 = _reference(x3, t3)
    assert jnp.allclose(loss3, ref3, rtol=2e-2, atol=2e-2), (loss3, ref3)

    # 4) rows (=80) not divisible by the tile: exercises the in-kernel masked tail
    #    block (and the clamped index map) with zero wrapper-side padding.
    x4, t4 = make_inputs(k3, (2, 5, 8, 16, 16))
    loss4 = jax.block_until_ready(
        dice_loss_normal2(x4, t4, target_block_bytes=32 * 1024))
    ref4 = _reference(x4, t4)
    assert jnp.allclose(loss4, ref4, rtol=1e-5, atol=1e-5), (loss4, ref4)

    print("KERNEL_OK")
</pallas_src>

<mosaic_0001>
module attributes {stable_mosaic.version = 11 : i64} {
  func.func @kernel(%arg0: i32, %arg1: i32, %arg2: memref<2x8x128xf32, #tpu.memory_space<vmem>>, %arg3: memref<2x8x128xf32, #tpu.memory_space<vmem>>, %arg4: memref<1x2x8x128xf32, #tpu.memory_space<vmem>>, %arg5: memref<1x2x8x128xf32, #tpu.memory_space<vmem>>) attributes {dimension_semantics = [#tpu.dimension_semantics<parallel>, #tpu.dimension_semantics<arbitrary>], iteration_bounds = array<i64: 1, 1>, scalar_prefetch = 0 : i64, scratch_operands = 0 : i64, tpu.core_type = #tpu.core_type<tc>, window_params = [{transform_indices = @transform_0, window_bounds = array<i64: 2, 8, 128>}, {transform_indices = @transform_1, window_bounds = array<i64: 2, 8, 128>}, {transform_indices = @transform_2, window_bounds = array<i64: 1, 2, 8, 128>}, {transform_indices = @transform_3, window_bounds = array<i64: 1, 2, 8, 128>}]} {
    %c0_i32 = arith.constant 0 : i32
    %0 = arith.cmpi eq, %arg1, %c0_i32 : i32
    %1 = arith.extui %0 : i1 to i32
    %c0_i32_0 = arith.constant 0 : i32
    %2 = arith.cmpi ne, %1, %c0_i32_0 : i32
    scf.if %2 {
      %cst_23 = arith.constant 0.000000e+00 : f32
      %23 = vector.broadcast %cst_23 : f32 to vector<2x8x128xf32>
      %c0_24 = arith.constant 0 : index
      %c0_25 = arith.constant 0 : index
      %c0_26 = arith.constant 0 : index
      %c0_27 = arith.constant 0 : index
      %24 = vector.load %arg4[%c0_24, %c0_25, %c0_26, %c0_27] : memref<1x2x8x128xf32, #tpu.memory_space<vmem>>, vector<1x2x8x128xf32>
      %25 = vector.shape_cast %24 : vector<1x2x8x128xf32> to vector<2x8x128xf32>
      %26 = vector.shape_cast %23 : vector<2x8x128xf32> to vector<1x2x8x128xf32>
      tpu.vector_store %arg4[%c0_24, %c0_25, %c0_26, %c0_27], %26 {strides = array<i32>} : memref<1x2x8x128xf32, #tpu.memory_space<vmem>>, vector<1x2x8x128xf32>,
      %cst_28 = arith.constant 0.000000e+00 : f32
      %27 = vector.broadcast %cst_28 : f32 to vector<2x8x128xf32>
      %c0_29 = arith.constant 0 : index
      %c0_30 = arith.constant 0 : index
      %c0_31 = arith.constant 0 : index
      %c0_32 = arith.constant 0 : index
      %28 = vector.load %arg5[%c0_29, %c0_30, %c0_31, %c0_32] : memref<1x2x8x128xf32, #tpu.memory_space<vmem>>, vector<1x2x8x128xf32>
      %29 = vector.shape_cast %28 : vector<1x2x8x128xf32> to vector<2x8x128xf32>
      %30 = vector.shape_cast %27 : vector<2x8x128xf32> to vector<1x2x8x128xf32>
      tpu.vector_store %arg5[%c0_29, %c0_30, %c0_31, %c0_32], %30 {strides = array<i32>} : memref<1x2x8x128xf32, #tpu.memory_space<vmem>>, vector<1x2x8x128xf32>,
    } else {
    }
    %c0 = arith.constant 0 : index
    %c0_1 = arith.constant 0 : index
    %c0_2 = arith.constant 0 : index
    %3 = vector.load %arg2[%c0, %c0_1, %c0_2] : memref<2x8x128xf32, #tpu.memory_space<vmem>>, vector<2x8x128xf32>
    %c0_3 = arith.constant 0 : index
    %c0_4 = arith.constant 0 : index
    %c0_5 = arith.constant 0 : index
    %4 = vector.load %arg3[%c0_3, %c0_4, %c0_5] : memref<2x8x128xf32, #tpu.memory_space<vmem>>, vector<2x8x128xf32>
    %c0_6 = arith.constant 0 : index
    %c0_7 = arith.constant 0 : index
    %c0_8 = arith.constant 0 : index
    %c0_9 = arith.constant 0 : index
    %5 = vector.load %arg4[%c0_6, %c0_7, %c0_8, %c0_9] : memref<1x2x8x128xf32, #tpu.memory_space<vmem>>, vector<1x2x8x128xf32>
    %6 = vector.shape_cast %5 : vector<1x2x8x128xf32> to vector<2x8x128xf32>
    %7 = arith.mulf %3, %4 : vector<2x8x128xf32>
    %8 = vector.shape_cast %7 : vector<2x8x128xf32> to vector<2x1x8x128xf32>
    %cst = arith.constant dense<0.000000e+00> : vector<2x8x128xf32>
    %9 = vector.multi_reduction <add>, %8, %cst [1] : vector<2x1x8x128xf32> to vector<2x8x128xf32>
    %10 = arith.addf %6, %9 : vector<2x8x128xf32>
    %c0_10 = arith.constant 0 : index
    %c0_11 = arith.constant 0 : index
    %c0_12 = arith.constant 0 : index
    %c0_13 = arith.constant 0 : index
    %11 = vector.load %arg4[%c0_10, %c0_11, %c0_12, %c0_13] : memref<1x2x8x128xf32, #tpu.memory_space<vmem>>, vector<1x2x8x128xf32>
    %12 = vector.shape_cast %11 : vector<1x2x8x128xf32> to vector<2x8x128xf32>
    %13 = vector.shape_cast %10 : vector<2x8x128xf32> to vector<1x2x8x128xf32>
    tpu.vector_store %arg4[%c0_10, %c0_11, %c0_12, %c0_13], %13 {strides = array<i32>} : memref<1x2x8x128xf32, #tpu.memory_space<vmem>>, vector<1x2x8x128xf32>,
    %c0_14 = arith.constant 0 : index
    %c0_15 = arith.constant 0 : index
    %c0_16 = arith.constant 0 : index
    %c0_17 = arith.constant 0 : index
    %14 = vector.load %arg5[%c0_14, %c0_15, %c0_16, %c0_17] : memref<1x2x8x128xf32, #tpu.memory_space<vmem>>, vector<1x2x8x128xf32>
    %15 = vector.shape_cast %14 : vector<1x2x8x128xf32> to vector<2x8x128xf32>
    %16 = arith.addf %3, %4 : vector<2x8x128xf32>
    %17 = vector.shape_cast %16 : vector<2x8x128xf32> to vector<2x1x8x128xf32>
    %cst_18 = arith.constant dense<0.000000e+00> : vector<2x8x128xf32>
    %18 = vector.multi_reduction <add>, %17, %cst_18 [1] : vector<2x1x8x128xf32> to vector<2x8x128xf32>
    %19 = arith.addf %15, %18 : vector<2x8x128xf32>
    %c0_19 = arith.constant 0 : index
    %c0_20 = arith.constant 0 : index
    %c0_21 = arith.constant 0 : index
    %c0_22 = arith.constant 0 : index
    %20 = vector.load %arg5[%c0_19, %c0_20, %c0_21, %c0_22] : memref<1x2x8x128xf32, #tpu.memory_space<vmem>>, vector<1x2x8x128xf32>
    %21 = vector.shape_cast %20 : vector<1x2x8x128xf32> to vector<2x8x128xf32>
    %22 = vector.shape_cast %19 : vector<2x8x128xf32> to vector<1x2x8x128xf32>
    tpu.vector_store %arg5[%c0_19, %c0_20, %c0_21, %c0_22], %22 {strides = array<i32>} : memref<1x2x8x128xf32, #tpu.memory_space<vmem>>, vector<1x2x8x128xf32>,
    return
  }
  func.func @transform_0(%arg0: i32, %arg1: i32) -> (i32, i32, i32) {
    %c1_i32 = arith.constant 1 : i32
    %0 = arith.muli %arg0, %c1_i32 : i32
    %1 = arith.addi %0, %arg1 : i32
    %c0_i32 = arith.constant 0 : i32
    %c0_i32_0 = arith.constant 0 : i32
    %c0_i32_1 = arith.constant 0 : i32
    return %c0_i32, %1, %c0_i32_0 : i32, i32, i32
  }
  func.func @transform_1(%arg0: i32, %arg1: i32) -> (i32, i32, i32) {
    %c1_i32 = arith.constant 1 : i32
    %0 = arith.muli %arg0, %c1_i32 : i32
    %1 = arith.addi %0, %arg1 : i32
    %c0_i32 = arith.constant 0 : i32
    %c0_i32_0 = arith.constant 0 : i32
    %c0_i32_1 = arith.constant 0 : i32
    return %c0_i32, %1, %c0_i32_0 : i32, i32, i32
  }
  func.func @transform_2(%arg0: i32, %arg1: i32) -> (i32, i32, i32, i32) {
    %c0_i32 = arith.constant 0 : i32
    %c0_i32_0 = arith.constant 0 : i32
    %c0_i32_1 = arith.constant 0 : i32
    %c0_i32_2 = arith.constant 0 : i32
    return %arg0, %c0_i32, %c0_i32_0, %c0_i32_1 : i32, i32, i32, i32
  }
  func.func @transform_3(%arg0: i32, %arg1: i32) -> (i32, i32, i32, i32) {
    %c0_i32 = arith.constant 0 : i32
    %c0_i32_0 = arith.constant 0 : i32
    %c0_i32_1 = arith.constant 0 : i32
    %c0_i32_2 = arith.constant 0 : i32
    return %arg0, %c0_i32, %c0_i32_0, %c0_i32_1 : i32, i32, i32, i32
  }
}

</mosaic_0001>

<llo_original>
// kernel: tpu_custom_call.1
$region0: #{tpu_custom_call.1}
  #allocation0 [shape = 'u32[]', space=smem, size = 0x4, offset = 0x4, fixed_abs, tag = 'smem constant byte address 0x4 - core index']
  #allocation1 [shape = 'u32[72,128]{1,0:T(1,128)}', space=vmem, size = 0x9000, scoped, tag = 'internal scratch']
  %s0 = inlined_call_operand.hbm [shape: f32[2,8,128], index: 0, kind: input, shape index: {}]
  %s1 = inlined_call_operand.hbm [shape: f32[2,8,128], index: 1, kind: input, shape index: {}]
  %s2 = inlined_call_operand.hbm [shape: f32[1,2,8,128], index: 2, kind: output, shape index: {0}]
  %s3 = inlined_call_operand.hbm [shape: f32[1,2,8,128], index: 3, kind: output, shape index: {1}]
  %4 = xla_tuple %s2, %s3
  %s5 = sld [smem:[#allocation0]]
  $region38: #{tpu_custom_call.1} parent=0
    _
  %s7 = ssub.s32 1, %s5
  %s8 = scalar_select 0, %s7, %s5
  $region1: #{tpu_custom_call.1} parent=0
    #allocation2 [shape = 'u8[8192]{0}', space=vmem, size = 0x2000, scoped, tag = 'input window, operand 0, single buffered']
    #allocation3 [shape = 's32[1]{0}', space=sflag, size = 0x4, scoped, tag = 'scoped memory for tpu_custom_call.1']
    #allocation4 [shape = 's32[1]{0}', space=sflag, size = 0x4, scoped, tag = 'scoped memory for tpu_custom_call.1']
    #allocation5 [shape = 'u8[8192]{0}', space=vmem, size = 0x2000, scoped, tag = 'input window, operand 1, single buffered']
    #allocation6 [shape = 's32[1]{0}', space=sflag, size = 0x4, scoped, tag = 'scoped memory for tpu_custom_call.1']
    #allocation7 [shape = 'u8[8192]{0}', space=vmem, size = 0x2000, scoped, tag = 'output window, operand 0, single buffered']
    #allocation8 [shape = 'u8[8192]{0}', space=vmem, size = 0x2000, scoped, tag = 'output window, operand 1, single buffered']
    #allocation9 [shape = 's32[1]{0}', space=sflag, size = 0x4, scoped, tag = 'scoped memory for tpu_custom_call.1']
    %9 = vsyncpa [#allocation3], 0
    %10 = vsyncpa [#allocation6], 0
    %11 = vsyncpa [#allocation4], 0
    %12 = vsyncpa [#allocation9], 0
    // Predicated region
    $region2: #{tpu_custom_call.1} parent=1 // pred_check
      _
    $region3: #{tpu_custom_call.1} parent=1 // pred_check_branch
      %14 = sbr.rel (0) target = $region5
    $region4: #{tpu_custom_call.1} parent=1 // pred_region
      %s15 = sadd.s32 0, 0
      %17 = vsyncadd [#allocation3], 0
      %s18 = smul.addr %s15, 8
      %s19 = scalar_lea.hbm %s0, %s18
      %s20 = sshll.u32 %s19, 4
      %s21 = int_to_ptr.hbm [resolvable:$true] %s20
      %s22 = sshll.u32 [#allocation2], 4
      %s23 = int_to_ptr.vmem [resolvable:$true] %s22
      %28 = dma.hbm_to_vmem [thread:$0]  %s21, 256, %s23, [#allocation3], 128, 128, 8
    $region5: #{tpu_custom_call.1} parent=1 // pred_fallthru
      _
    // Predicated region
    $region6: #{tpu_custom_call.1} parent=1 // pred_check
      _
    $region7: #{tpu_custom_call.1} parent=1 // pred_check_branch
      %30 = sbr.rel (0) target = $region9
    $region8: #{tpu_custom_call.1} parent=1 // pred_region
      %s31 = sadd.s32 0, 0
      %33 = vsyncadd [#allocation6], 0
      %s34 = smul.addr %s31, 8
      %s35 = scalar_lea.hbm %s1, %s34
      %s36 = sshll.u32 %s35, 4
      %s37 = int_to_ptr.hbm [resolvable:$true] %s36
      %s38 = sshll.u32 [#allocation5], 4
      %s39 = int_to_ptr.vmem [resolvable:$true] %s38
      %44 = dma.hbm_to_vmem [thread:$0]  %s37, 256, %s39, [#allocation6], 128, 128, 8
    $region9: #{tpu_custom_call.1} parent=1 // pred_fallthru
      _
    // Predicated region
    $region10: #{tpu_custom_call.1} parent=1 // pred_check
      _
    $region11: #{tpu_custom_call.1} parent=1 // pred_check_branch
      %46 = sbr.rel (0) target = $region13
    $region12: #{tpu_custom_call.1} parent=1 // pred_region
      %48 = dma.done [#allocation3], 256
    $region13: #{tpu_custom_call.1} parent=1 // pred_fallthru
      _
    // Predicated region
    $region14: #{tpu_custom_call.1} parent=1 // pred_check
      _
    $region15: #{tpu_custom_call.1} parent=1 // pred_check_branch
      %50 = sbr.rel (0) target = $region17
    $region16: #{tpu_custom_call.1} parent=1 // pred_region
      %52 = dma.done [#allocation6], 256
    $region17: #{tpu_custom_call.1} parent=1 // pred_fallthru
      _
    %s53 = sadd.s32 0, 0
    %s54 = sadd.s32 0, 0
    %p55 = scmp.eq.s32.totalorder 0, 0
    // Predicated region
    $region18: #{tpu_custom_call.1} parent=1 // pred_check
      %p56 = pneg %p55
    $region19: #{tpu_custom_call.1} parent=1 // pred_check_branch
      %58 = sbr.rel (%p56) target = $region21
    $region20: #{tpu_custom_call.1} parent=1 // pred_region
      %59 = vst [vmem:[#allocation7] sm:$0xff] 0.0
      %60 = vst [vmem:[#allocation7 + $0x8] sm:$0xff] 0.0
      %61 = vst [vmem:[#allocation8] sm:$0xff] 0.0
      %62 = vst [vmem:[#allocation8 + $0x8] sm:$0xff] 0.0
    $region21: #{tpu_custom_call.1} parent=1 // pred_fallthru
      _
    %v63 = vld [vmem:[#allocation2] sm:$0xff]
    %v64 = vld [vmem:[#allocation2 + $0x8] sm:$0xff]
    %v65 = vld [vmem:[#allocation5] sm:$0xff]
    %v66 = vld [vmem:[#allocation5 + $0x8] sm:$0xff]
    %v67 = vld [vmem:[#allocation7] sm:$0xff]
    %v68 = vld [vmem:[#allocation7 + $0x8] sm:$0xff]
    %v69 = vmul.f32 %v63, %v65
    %v70 = vmul.f32 %v64, %v66
    %v71 = vadd.f32 %v69, 0.0
    %v72 = vadd.f32 %v70, 0.0
    %v73 = vadd.f32 %v67, %v71
    %v74 = vadd.f32 %v68, %v72
    %75 = vst [vmem:[#allocation7] sm:$0xff] %v73
    %76 = vst [vmem:[#allocation7 + $0x8] sm:$0xff] %v74
    %v77 = vld [vmem:[#allocation8] sm:$0xff]
    %v78 = vld [vmem:[#allocation8 + $0x8] sm:$0xff]
    %v79 = vadd.f32 %v63, %v65
    %v80 = vadd.f32 %v64, %v66
    %v81 = vadd.f32 %v79, 0.0
    %v82 = vadd.f32 %v80, 0.0
    %v83 = vadd.f32 %v77, %v81
    %v84 = vadd.f32 %v78, %v82
    %85 = vst [vmem:[#allocation8] sm:$0xff] %v83
    %86 = vst [vmem:[#allocation8 + $0x8] sm:$0xff] %v84
    // Predicated region
    $region22: #{tpu_custom_call.1} parent=1 // pred_check
      _
    $region23: #{tpu_custom_call.1} parent=1 // pred_check_branch
      %88 = sbr.rel (0) target = $region25
    $region24: #{tpu_custom_call.1} parent=1 // pred_region
      %90 = vsyncadd [#allocation4], 0
      %s91 = sshll.u32 [#allocation7], 4
      %s92 = int_to_ptr.vmem [resolvable:$true] %s91
      %s93 = sshll.u32 %s2, 4
      %s94 = int_to_ptr.hbm [resolvable:$true] %s93
      %99 = dma.vmem_to_hbm [thread:$0]  %s92, 256, %s94, [#allocation4], 128, 128, 8
    $region25: #{tpu_custom_call.1} parent=1 // pred_fallthru
      _
    // Predicated region
    $region26: #{tpu_custom_call.1} parent=1 // pred_check
      _
    $region27: #{tpu_custom_call.1} parent=1 // pred_check_branch
      %101 = sbr.rel (0) target = $region29
    $region28: #{tpu_custom_call.1} parent=1 // pred_region
      %103 = vsyncadd [#allocation9], 0
      %s104 = sshll.u32 [#allocation8], 4
      %s105 = int_to_ptr.vmem [resolvable:$true] %s104
      %s106 = sshll.u32 %s3, 4
      %s107 = int_to_ptr.hbm [resolvable:$true] %s106
      %112 = dma.vmem_to_hbm [thread:$0]  %s105, 256, %s107, [#allocation9], 128, 128, 8
    $region29: #{tpu_custom_call.1} parent=1 // pred_fallthru
      _
    // Predicated region
    $region30: #{tpu_custom_call.1} parent=1 // pred_check
      _
    $region31: #{tpu_custom_call.1} parent=1 // pred_check_branch
      %114 = sbr.rel (0) target = $region33
    $region32: #{tpu_custom_call.1} parent=1 // pred_region
      %116 = dma.done [#allocation4], 256
    $region33: #{tpu_custom_call.1} parent=1 // pred_fallthru
      _
    // Predicated region
    $region34: #{tpu_custom_call.1} parent=1 // pred_check
      _
    $region35: #{tpu_custom_call.1} parent=1 // pred_check_branch
      %118 = sbr.rel (0) target = $region37
    $region36: #{tpu_custom_call.1} parent=1 // pred_region
      %120 = dma.done [#allocation9], 256
    $region37: #{tpu_custom_call.1} parent=1 // pred_fallthru
      _
    %121 = vsyncpa [#allocation3], 1
    %122 = vsyncpa [#allocation6], 1
    %123 = vsyncpa [#allocation4], 1
    %124 = vsyncpa [#allocation9], 1

</llo_original>
